<compile_context>
chip_gen: v6e
topology: v6e:2x2x1
jax: 0.10.0
libtpu: 0.0.40
codegen_flags: <defaults>
</compile_context>

<pallas_src>
import functools
import math

import jax
import jax.numpy as jnp
from jax.experimental import pallas as pl
from jax.experimental.pallas import tpu as pltpu


def _round_up(x, m):
    return (x + m - 1) // m * m


# ----------------------------------------------------------------------------
# Pallas kernel: one (type-homogeneous) column tile
#   h = act(W1[t] @ Xt + b1[t])     [H, TM]  (bf16 MXU, f32 accum; VPU/EUP)
#   o = sum_H(w2[t] * h) + b2[t]    [1, TM]  (VPU mul + XLU sublane reduce)
# ----------------------------------------------------------------------------
def _critic_kernel(tid_ref, xt_ref, w1_ref, b1_ref, w2_ref, b2_ref, o_ref,
                   *, activation):
    xt = xt_ref[...]                                               # [F, TM] bf16
    w1 = w1_ref[0]                                                 # [H, F]  bf16
    h = jnp.dot(w1, xt, preferred_element_type=jnp.float32)        # [H, TM] f32 (MXU)
    h = h + b1_ref[0]                                              # bias (f32 VPU)
    # TODO(synk): apply_net's activation source not provided; default 'relu'
    # (the xavier gain('sigmoid') init hints sigmoid/tanh, supported below).
    if activation == "relu":
        h = jnp.maximum(h, 0.0)
    elif activation == "sigmoid":
        h = jax.nn.sigmoid(h)                                      # EUP (free slot)
    elif activation == "tanh":
        h = jnp.tanh(h)
    else:
        raise ValueError(f"unsupported activation: {activation}")
    o = jnp.sum(h * w2_ref[0], axis=0, keepdims=True)              # [1, TM]
    t = tid_ref[pl.program_id(0)]                                  # SMEM scalar
    o_ref[...] = (o + b2_ref[t]).astype(o_ref.dtype)               # lane-dense store


def _critic_pallas(tile_tid, xt_all, w1, b1, w2, b2, *, tm, activation):
    """tile_tid: [n_tiles] i32, xt_all: [F, M] bf16 -> [1, M] f32 (all types, one launch)."""
    F, M = xt_all.shape
    T, H, _ = w1.shape
    n_tiles = M // tm

    # VMEM footprint: double-buffered X/out tiles + resident weights + h temp.
    vmem_bytes = (2 * F * tm * 2 + H * tm * 4 + 2 * tm * 4
                  + 2 * (H * F * 2 + 2 * H * 4))
    vmem_limit = int(min(max(4 * vmem_bytes, 16 << 20), 64 << 20))

    cost = pl.CostEstimate(
        flops=2 * H * F * M + 3 * H * M,
        transcendentals=(H * M if activation in ("sigmoid", "tanh") else 0),
        bytes_accessed=F * M * 2 + M * 4 + T * (H * F * 2 + 2 * H * 4 + 4),
    )

    kernel = functools.partial(_critic_kernel, activation=activation)
    return pl.pallas_call(
        kernel,
        out_shape=jax.ShapeDtypeStruct((1, M), jnp.float32),
        grid_spec=pltpu.PrefetchScalarGridSpec(
            num_scalar_prefetch=1,
            grid=(n_tiles,),
            in_specs=[
                pl.BlockSpec((F, tm), lambda m, tid: (0, m)),        # X tile (pipelined)
                pl.BlockSpec((1, H, F), lambda m, tid: (tid[m], 0, 0)),  # W1[type of tile]
                pl.BlockSpec((1, H, 1), lambda m, tid: (tid[m], 0, 0)),  # b1[type]
                pl.BlockSpec((1, H, 1), lambda m, tid: (tid[m], 0, 0)),  # w2[type] (column)
                pl.BlockSpec(memory_space=pltpu.MemorySpace.SMEM),       # b2: [T] scalars
            ],
            out_specs=pl.BlockSpec((1, tm), lambda m, tid: (0, m)),
        ),
        compiler_params=pltpu.CompilerParams(
            dimension_semantics=("parallel",),     # flat tile axis -> megacore on v7x
            vmem_limit_bytes=vmem_limit),
        cost_estimate=cost,
    )(tile_tid, xt_all, w1, b1, w2, b2)


# ----------------------------------------------------------------------------
# Parameter construction (deterministic, PyTorch-equivalent init rules)
# ----------------------------------------------------------------------------
def _xavier_uniform(key, shape, gain=1.0):
    fan_out, fan_in = shape  # PyTorch Linear weight is [out, in]
    bound = gain * math.sqrt(6.0 / (fan_in + fan_out))
    return jax.random.uniform(key, shape, jnp.float32, -bound, bound)


def _linear_bias(key, fan_in, shape):
    bound = 1.0 / math.sqrt(fan_in)
    return jax.random.uniform(key, shape, jnp.float32, -bound, bound)


def make_params(key, n_types, input_size, hidden_size):
    """layer1[nt]: Linear(input_size, hidden_size); layer2[nt]: Linear(hidden_size, 1)."""
    params = []
    for _ in range(n_types):
        key, k1, k2, k3, k4 = jax.random.split(key, 5)
        w1 = _xavier_uniform(k1, (hidden_size, input_size), gain=1.0)  # gain('sigmoid') == 1.0
        b1 = _linear_bias(k2, input_size, (hidden_size,))
        w2 = _xavier_uniform(k3, (1, hidden_size), gain=1.0)
        b2 = _linear_bias(k4, hidden_size, (1,))
        params.append(dict(w1=w1, b1=b1, w2=w2, b2=b2))
    return params


def pack_params(params):
    """One-time packing into kernel layout (stacked over types, pre-cast)."""
    w1 = jnp.stack([p["w1"] for p in params]).astype(jnp.bfloat16)      # [T, H, F] bf16
    b1 = jnp.stack([p["b1"].reshape(-1, 1) for p in params])            # [T, H, 1] f32
    w2 = jnp.stack([p["w2"].reshape(-1, 1) for p in params])            # [T, H, 1] f32
    b2 = jnp.stack([p["b2"].reshape(()) for p in params])               # [T]       f32
    return dict(w1=w1, b1=b1, w2=w2, b2=b2)


# ----------------------------------------------------------------------------
# SeperateCritic.forward
# ----------------------------------------------------------------------------
def seperate_critic_forward(packed, obs, act, node_type, *, activation="relu"):
    """obs/act: dict nt -> [N_nt, F]; node_type: [N_total] int array.

    Returns dict nt -> (node_indices, output [N_nt, 2, 1]) zero-padded along
    the node axis to the max N across types.
    """
    types = sorted(obs.keys())                # static; mirrors node_type.unique()
    T, H, F = packed["w1"].shape

    # ---- tile width from a VMEM formula (no hard 512 cap) -----------------
    max_m = max(2 * obs[nt].shape[0] for nt in types)
    per_col = 2 * F * 2 + H * 4 + 2 * 4                 # VMEM bytes per column
    cap = max(128, ((8 << 20) // per_col) // 128 * 128)
    tm = int(min(4096, cap, _round_up(max_m, 128)))

    # ---- ragged packing: per type [obs.T | act.T | pad], one flat slab ----
    cols, tile_tid, col_off = [], [], {}
    off = 0
    for ti, nt in enumerate(types):
        o = obs[nt].astype(jnp.bfloat16).T              # cast BEFORE transpose/pad
        a = act[nt].astype(jnp.bfloat16).T
        m = o.shape[1] + a.shape[1]
        m_pad = _round_up(m, tm)                        # pad only to tile width
        cols.append(jnp.concatenate((o, a), axis=1))    # [F, 2N]
        if m_pad > m:
            cols.append(jnp.zeros((F, m_pad - m), jnp.bfloat16))
        col_off[nt] = off
        tile_tid += [ti] * (m_pad // tm)
        off += m_pad
    xt_all = jnp.concatenate(cols, axis=1)              # [F, sum(M_pad_t)] bf16
    tile_tid = jnp.asarray(tile_tid, dtype=jnp.int32)   # per-tile type ids

    out_all = _critic_pallas(tile_tid, xt_all, packed["w1"], packed["b1"],
                             packed["w2"], packed["b2"],
                             tm=tm, activation=activation)   # [1, M_total] f32

    output_dict = {}
    for nt in types:
        n = obs[nt].shape[0]
        base = col_off[nt]
        o_obs = out_all[0, base: base + n]               # static slices
        o_act = out_all[0, base + n: base + 2 * n]
        out = jnp.stack((o_obs, o_act), axis=1)[..., None]    # [N, 2, 1]
        node_indices = jnp.nonzero(node_type == nt, size=n)[0]  # no host sync
        output_dict[nt] = (node_indices, out)

    # torch code: unsqueeze(0) if output ended up 1-D (never the case here).
    # TODO(synk): `_pad` source not provided; zero-pad along the node axis to
    # the max node count across types as a stand-in.
    max_n = max(obs[nt].shape[0] for nt in types)
    padded = {}
    for nt, (idx, out) in output_dict.items():
        pad_n = max_n - out.shape[0]
        padded[nt] = (idx, jnp.pad(out, ((0, pad_n), (0, 0), (0, 0))))
    return padded


# ----------------------------------------------------------------------------
# Reference (plain jnp, mirroring the kernel's bf16 layer-1 quantization)
# ----------------------------------------------------------------------------
def _ref_forward(params, obs, act, nt, activation="relu"):
    x = jnp.stack((obs[nt], act[nt]), axis=1).astype(jnp.float32)       # [N, 2, F]
    p = params[nt]
    xb = x.astype(jnp.bfloat16)
    w1b = p["w1"].astype(jnp.bfloat16)
    h = jnp.dot(xb, w1b.T, preferred_element_type=jnp.float32) + p["b1"]
    if activation == "relu":
        h = jnp.maximum(h, 0.0)
    elif activation == "sigmoid":
        h = jax.nn.sigmoid(h)
    else:
        h = jnp.tanh(h)
    o = jnp.sum(h * p["w2"].reshape(1, 1, -1), axis=-1, keepdims=True) + p["b2"]
    return o                                                            # [N, 2, 1]


if __name__ == "__main__":
    key = jax.random.PRNGKey(0)

    input_size = 16
    hidden_size = 32
    output_sizes = [5, 7]          # len == number of node types (2 critic heads)
    n_types = len(output_sizes)

    # 6 nodes total, types [0,0,1,0,1,1]
    node_type = jnp.array([0, 0, 1, 0, 1, 1], dtype=jnp.int32)
    n_by_type = {0: 3, 1: 3}

    key, kp = jax.random.split(key)
    params = make_params(kp, n_types, input_size, hidden_size)
    packed = pack_params(params)

    obs, act = {}, {}
    for nt in range(n_types):
        key, ko, ka = jax.random.split(key, 3)
        obs[nt] = jax.random.normal(ko, (n_by_type[nt], input_size), jnp.float32)
        act[nt] = jax.random.normal(ka, (n_by_type[nt], input_size), jnp.float32)

    fwd = jax.jit(functools.partial(seperate_critic_forward, activation="relu"))
    out_dict = fwd(packed, obs, act, node_type)
    for nt in out_dict:
        jax.block_until_ready(out_dict[nt][1])

    # correctness check against plain-JAX reference
    ok = True
    for nt in range(n_types):
        ref = _ref_forward(params, obs, act, nt)                 # [N, 2, 1]
        got = out_dict[nt][1][: ref.shape[0]]
        ok &= bool(jnp.allclose(ref, got, atol=1e-3, rtol=1e-3))

    if ok:
        print("KERNEL_OK")
    else:
        print("MISMATCH")
</pallas_src>

<mosaic_0001>
module attributes {stable_mosaic.version = 11 : i64} {
  func.func @_critic_kernel(%arg0: i32, %arg1: memref<2xi32, #tpu.memory_space<smem>>, %arg2: memref<16x128xbf16, #tpu.memory_space<vmem>>, %arg3: memref<1x32x16xbf16, #tpu.memory_space<vmem>>, %arg4: memref<1x32x1xf32, #tpu.memory_space<vmem>>, %arg5: memref<1x32x1xf32, #tpu.memory_space<vmem>>, %arg6: memref<2xf32, #tpu.memory_space<smem>>, %arg7: memref<1x128xf32, #tpu.memory_space<vmem>>) attributes {dimension_semantics = [#tpu.dimension_semantics<parallel>], iteration_bounds = array<i64: 2>, scalar_prefetch = 1 : i64, scratch_operands = 0 : i64, tpu.core_type = #tpu.core_type<tc>, window_params = [{transform_indices = @transform_0, window_bounds = array<i64: 16, 128>}, {transform_indices = @transform_1, window_bounds = array<i64: 1, 32, 16>}, {transform_indices = @transform_2, window_bounds = array<i64: 1, 32, 1>}, {transform_indices = @transform_3, window_bounds = array<i64: 1, 32, 1>}, {transform_indices = @transform_4, window_bounds = array<i64: 2>}, {transform_indices = @transform_5, window_bounds = array<i64: 1, 128>}]} {
    %c0 = arith.constant 0 : index
    %c0_0 = arith.constant 0 : index
    %0 = vector.load %arg2[%c0, %c0_0] : memref<16x128xbf16, #tpu.memory_space<vmem>>, vector<16x128xbf16>
    %c0_1 = arith.constant 0 : index
    %c0_2 = arith.constant 0 : index
    %c0_3 = arith.constant 0 : index
    %1 = vector.load %arg3[%c0_1, %c0_2, %c0_3] : memref<1x32x16xbf16, #tpu.memory_space<vmem>>, vector<1x32x16xbf16>
    %2 = vector.shape_cast %1 : vector<1x32x16xbf16> to vector<32x16xbf16>
    %cst = arith.constant dense<0.000000e+00> : vector<32x128xf32>
    %3 = tpu.matmul %2, %0, %cst {dimension_numbers = #tpu.dot_dimension_numbers<[1], [0], [0], [1], [0, 0, 1, 1], [], []>} : vector<32x16xbf16>, vector<16x128xbf16>, vector<32x128xf32> -> vector<32x128xf32>
    %c0_4 = arith.constant 0 : index
    %c0_5 = arith.constant 0 : index
    %c0_6 = arith.constant 0 : index
    %4 = vector.load %arg4[%c0_4, %c0_5, %c0_6] : memref<1x32x1xf32, #tpu.memory_space<vmem>>, vector<1x32x1xf32>
    %5 = vector.shape_cast %4 : vector<1x32x1xf32> to vector<32x1xf32>
    %6 = vector.broadcast %5 : vector<32x1xf32> to vector<32x128xf32>
    %7 = arith.addf %3, %6 : vector<32x128xf32>
    %cst_7 = arith.constant 0.000000e+00 : f32
    %8 = vector.broadcast %cst_7 : f32 to vector<32x128xf32>
    %9 = arith.maximumf %7, %8 : vector<32x128xf32>
    %c0_8 = arith.constant 0 : index
    %c0_9 = arith.constant 0 : index
    %c0_10 = arith.constant 0 : index
    %10 = vector.load %arg5[%c0_8, %c0_9, %c0_10] : memref<1x32x1xf32, #tpu.memory_space<vmem>>, vector<1x32x1xf32>
    %11 = vector.shape_cast %10 : vector<1x32x1xf32> to vector<32x1xf32>
    %12 = vector.broadcast %11 : vector<32x1xf32> to vector<32x128xf32>
    %13 = arith.mulf %9, %12 : vector<32x128xf32>
    %cst_11 = arith.constant dense<0.000000e+00> : vector<128xf32>
    %14 = vector.multi_reduction <add>, %13, %cst_11 [0] : vector<32x128xf32> to vector<128xf32>
    %15 = vector.shape_cast %14 : vector<128xf32> to vector<1x128xf32>
    %16 = arith.index_cast %arg0 : i32 to index
    %17 = memref.load %arg1[%16] : memref<2xi32, #tpu.memory_space<smem>>
    %18 = arith.index_cast %17 : i32 to index
    %19 = memref.load %arg6[%18] : memref<2xf32, #tpu.memory_space<smem>>
    %20 = vector.broadcast %19 : f32 to vector<1x128xf32>
    %21 = arith.addf %15, %20 : vector<1x128xf32>
    %c0_12 = arith.constant 0 : index
    %c0_13 = arith.constant 0 : index
    %22 = vector.load %arg7[%c0_12, %c0_13] : memref<1x128xf32, #tpu.memory_space<vmem>>, vector<1x128xf32>
    tpu.vector_store %arg7[%c0_12, %c0_13], %21 {strides = array<i32>} : memref<1x128xf32, #tpu.memory_space<vmem>>, vector<1x128xf32>,
    return
  }
  func.func @transform_0(%arg0: i32, %arg1: memref<2xi32, #tpu.memory_space<smem>>) -> (i32, i32) {
    %c0_i32 = arith.constant 0 : i32
    %c0_i32_0 = arith.constant 0 : i32
    return %c0_i32, %arg0 : i32, i32
  }
  func.func @transform_1(%arg0: i32, %arg1: memref<2xi32, #tpu.memory_space<smem>>) -> (i32, i32, i32) {
    %0 = arith.index_cast %arg0 : i32 to index
    %1 = memref.load %arg1[%0] : memref<2xi32, #tpu.memory_space<smem>>
    %c0_i32 = arith.constant 0 : i32
    %c0_i32_0 = arith.constant 0 : i32
    %c0_i32_1 = arith.constant 0 : i32
    return %1, %c0_i32, %c0_i32_0 : i32, i32, i32
  }
  func.func @transform_2(%arg0: i32, %arg1: memref<2xi32, #tpu.memory_space<smem>>) -> (i32, i32, i32) {
    %0 = arith.index_cast %arg0 : i32 to index
    %1 = memref.load %arg1[%0] : memref<2xi32, #tpu.memory_space<smem>>
    %c0_i32 = arith.constant 0 : i32
    %c0_i32_0 = arith.constant 0 : i32
    %c0_i32_1 = arith.constant 0 : i32
    return %1, %c0_i32, %c0_i32_0 : i32, i32, i32
  }
  func.func @transform_3(%arg0: i32, %arg1: memref<2xi32, #tpu.memory_space<smem>>) -> (i32, i32, i32) {
    %0 = arith.index_cast %arg0 : i32 to index
    %1 = memref.load %arg1[%0] : memref<2xi32, #tpu.memory_space<smem>>
    %c0_i32 = arith.constant 0 : i32
    %c0_i32_0 = arith.constant 0 : i32
    %c0_i32_1 = arith.constant 0 : i32
    return %1, %c0_i32, %c0_i32_0 : i32, i32, i32
  }
  func.func @transform_4(%arg0: i32, %arg1: memref<2xi32, #tpu.memory_space<smem>>) -> i32 {
    %c0_i32 = arith.constant 0 : i32
    %c0_i32_0 = arith.constant 0 : i32
    return %c0_i32 : i32
  }
  func.func @transform_5(%arg0: i32, %arg1: memref<2xi32, #tpu.memory_space<smem>>) -> (i32, i32) {
    %c0_i32 = arith.constant 0 : i32
    %c0_i32_0 = arith.constant 0 : i32
    return %c0_i32, %arg0 : i32, i32
  }
}

</mosaic_0001>

<llo_original>
// kernel: seperate_critic_forward.1
$region0: #{seperate_critic_forward.1}
  #allocation0 [shape = 'u32[]', space=smem, size = 0x4, offset = 0x4, fixed_abs, tag = 'smem constant byte address 0x4 - core index']
  #allocation1 [shape = 'u32[144,128]{1,0:T(1,128)}', space=vmem, size = 0x12000, scoped, tag = 'internal scratch']
  #allocation2 [shape = 's32[1]{0}', space=sflag, size = 0x4, scoped, tag = 'scoped memory for seperate_critic_forward.1']
  #allocation3 [shape = 'u8[512]{0}', space=smem, size = 0x200, scoped, tag = 'prefetched SMEM operand 0']
  %s0 = inlined_call_operand.vmem [shape: s32[2], index: 0, kind: input, shape index: {}]
  %s1 = inlined_call_operand.vmem [shape: bf16[16,256], index: 1, kind: input, shape index: {}]
  %s2 = inlined_call_operand.vmem [shape: bf16[2,32,16], index: 2, kind: input, shape index: {}]
  %s3 = inlined_call_operand.vmem [shape: f32[2,32,1], index: 3, kind: input, shape index: {}]
  %s4 = inlined_call_operand.vmem [shape: f32[2,32,1], index: 4, kind: input, shape index: {}]
  %s5 = inlined_call_operand.vmem [shape: f32[2], index: 5, kind: input, shape index: {}]
  %s6 = inlined_call_operand.vmem [shape: f32[1,256], index: 6, kind: output, shape index: {}]
  %s7 = sld [smem:[#allocation0]]
  $region98: #{seperate_critic_forward.1} parent=0
    _
  %s9 = ssub.s32 1, %s7
  %s10 = scalar_select 0, %s9, %s7
  %s11 = sshll.u32 %s0, 4
  %s12 = int_to_ptr.vmem [resolvable:$true] %s11
  %14 = dma.vmem_to_smem %s12, 16, [#allocation3], [#allocation2]
  %15 = dma.done [#allocation2], 16
  %16 = sfence
  $region1: #{seperate_critic_forward.1} parent=0
    #allocation4 [shape = 'u8[8192]{0}', space=vmem, size = 0x2000, scoped, tag = 'input window, operand 1']
    #allocation5 [shape = 'u8[512]{0}', space=smem, size = 0x200, scoped, tag = 'input window, operand 5, single buffered']
    #allocation6 [shape = 's32[2]{0}', space=sflag, size = 0x8, scoped, tag = 'scoped memory for seperate_critic_forward.1']
    %17 = vsyncpa [#allocation6], 0
    loop: start=0, step=1, limit=4
    $region2: #{seperate_critic_forward.1} parent=1 // loop_pre_header
      _
    $region3: #{seperate_critic_forward.1} parent=1 // loop_header
      %s19 = sphi 0, %s23
      %p20 = scmp.ge.s32.totalorder %s19, 4
      %s29 = sphi 0, %s31
      %s32 = sphi 0, %s29
      %s33 = sphi 0, %s32
      %s49 = sphi 0, %s33
      %s57 = sphi 0, %s59
      %s60 = sphi 0, %s57
      %s61 = sphi 0, %s60
      %s77 = sphi 0, %s61
      %s85 = sphi 0, %s87
      %s88 = sphi 0, %s85
      %s89 = sphi 0, %s88
      %s105 = sphi 0, %s89
      %s113 = sphi 0, %s115
      %s116 = sphi 0, %s113
      %s117 = sphi 0, %s116
      %s133 = sphi 0, %s117
      %s137 = sphi 0, %s137
      %s139 = sphi 0, %s137
      %s140 = sphi 0, %s139
      %s154 = sphi 0, %s140
      %s160 = sphi 0, %s162
      %s163 = sphi 0, %s160
      %s164 = sphi 0, %s163
      %s180 = sphi 0, %s164
    $region4: #{seperate_critic_forward.1} parent=1 // loop_header_branch
      %22 = sbr.rel (%p20) target = $region8
    $region5: #{seperate_critic_forward.1} parent=1 // loop_body
      %s24 = ssub.s32 %s19, 1
      %s25 = ssub.s32 %s19, 2
      %s26 = sadd.s32 %s19, 1
      %s27 = ssub.s32 %s19, %s26
      %p28 = scmp.eq.s32.totalorder %s27, 0
      %s30 = sadd.s32 %s29, 1
      %s31 = scalar_select %p28, %s29, %s30
      %p34 = pneg %p28
      %p35 = scmp.eq.s32.totalorder %s19, 1
      %p36 = por %p34, %p35
      %p37 = scmp.ne.s32.totalorder %s29, %s32
      %p38 = scmp.eq.s32.totalorder %s19, 0
      %p39 = por %p37, %p38
      %p40 = scmp.ne.s32.totalorder %s29, %s32
      %p41 = scmp.eq.s32.totalorder %s24, 1
      %p42 = por %p40, %p41
      %p43 = scmp.ne.s32.totalorder %s32, %s33
      %p44 = scmp.eq.s32.totalorder %s24, 0
      %p45 = por %p43, %p44
      %p46 = scmp.ne.s32.totalorder %s32, %s33
      %p47 = scmp.eq.s32.totalorder %s25, 1
      %p48 = por %p46, %p47
      %p50 = scmp.ne.s32.totalorder %s33, %s49
      %p51 = scmp.eq.s32.totalorder %s25, 0
      %p52 = por %p50, %p51
      %s53 = sld [smem:[#allocation3 + %s19]]
      %s54 = sld [smem:[#allocation3 + %s26]]
      %s55 = ssub.s32 %s53, %s54
      %p56 = scmp.eq.s32.totalorder %s55, 0
      %s58 = sadd.s32 %s57, 1
      %s59 = scalar_select %p56, %s57, %s58
      %p62 = pneg %p56
      %p63 = scmp.eq.s32.totalorder %s19, 1
      %p64 = por %p62, %p63
      %p65 = scmp.ne.s32.totalorder %s57, %s60
      %p66 = scmp.eq.s32.totalorder %s19, 0
      %p67 = por %p65, %p66
      %p68 = scmp.ne.s32.totalorder %s57, %s60
      %p69 = scmp.eq.s32.totalorder %s24, 1
      %p70 = por %p68, %p69
      %p71 = scmp.ne.s32.totalorder %s60, %s61
      %p72 = scmp.eq.s32.totalorder %s24, 0
      %p73 = por %p71, %p72
      %p74 = scmp.ne.s32.totalorder %s60, %s61
      %p75 = scmp.eq.s32.totalorder %s25, 1
      %p76 = por %p74, %p75
      %p78 = scmp.ne.s32.totalorder %s61, %s77
      %p79 = scmp.eq.s32.totalorder %s25, 0
      %p80 = por %p78, %p79
      %s81 = sld [smem:[#allocation3 + %s19]]
      %s82 = sld [smem:[#allocation3 + %s26]]
      %s83 = ssub.s32 %s81, %s82
      %p84 = scmp.eq.s32.totalorder %s83, 0
      %s86 = sadd.s32 %s85, 1
      %s87 = scalar_select %p84, %s85, %s86
      %p90 = pneg %p84
      %p91 = scmp.eq.s32.totalorder %s19, 1
      %p92 = por %p90, %p91
      %p93 = scmp.ne.s32.totalorder %s85, %s88
      %p94 = scmp.eq.s32.totalorder %s19, 0
      %p95 = por %p93, %p94
      %p96 = scmp.ne.s32.totalorder %s85, %s88
      %p97 = scmp.eq.s32.totalorder %s24, 1
      %p98 = por %p96, %p97
      %p99 = scmp.ne.s32.totalorder %s88, %s89
      %p100 = scmp.eq.s32.totalorder %s24, 0
      %p101 = por %p99, %p100
      %p102 = scmp.ne.s32.totalorder %s88, %s89
      %p103 = scmp.eq.s32.totalorder %s25, 1
      %p104 = por %p102, %p103
      %p106 = scmp.ne.s32.totalorder %s89, %s105
      %p107 = scmp.eq.s32.totalorder %s25, 0
      %p108 = por %p106, %p107
      %s109 = sld [smem:[#allocation3 + %s19]]
      %s110 = sld [smem:[#allocation3 + %s26]]
      %s111 = ssub.s32 %s109, %s110
      %p112 = scmp.eq.s32.totalorder %s111, 0
      %s114 = sadd.s32 %s113, 1
      %s115 = scalar_select %p112, %s113, %s114
      %p118 = pneg %p112
      %p119 = scmp.eq.s32.totalorder %s19, 1
      %p120 = por %p118, %p119
      %p121 = scmp.ne.s32.totalorder %s113, %s116
      %p122 = scmp.eq.s32.totalorder %s19, 0
      %p123 = por %p121, %p122
      %p124 = scmp.ne.s32.totalorder %s113, %s116
      %p125 = scmp.eq.s32.totalorder %s24, 1
      %p126 = por %p124, %p125
      %p127 = scmp.ne.s32.totalorder %s116, %s117
      %p128 = scmp.eq.s32.totalorder %s24, 0
      %p129 = por %p127, %p128
      %p130 = scmp.ne.s32.totalorder %s116, %s117
      %p131 = scmp.eq.s32.totalorder %s25, 1
      %p132 = por %p130, %p131
      %p134 = scmp.ne.s32.totalorder %s117, %s133
      %p135 = scmp.eq.s32.totalorder %s25, 0
      %p136 = por %p134, %p135
      %s138 = sadd.s32 %s137, 1
      %p141 = scmp.eq.s32.totalorder %s19, 1
      %p142 = scmp.ne.s32.totalorder %s137, %s139
      %p143 = scmp.eq.s32.totalorder %s19, 0
      %p144 = por %p142, %p143
      %p145 = scmp.ne.s32.totalorder %s137, %s139
      %p146 = scmp.eq.s32.totalorder %s24, 1
      %p147 = por %p145, %p146
      %p148 = scmp.ne.s32.totalorder %s139, %s140
      %p149 = scmp.eq.s32.totalorder %s24, 0
      %p150 = por %p148, %p149
      %p151 = scmp.ne.s32.totalorder %s139, %s140
      %p152 = scmp.eq.s32.totalorder %s25, 1
      %p153 = por %p151, %p152
      %p155 = scmp.ne.s32.totalorder %s140, %s154
      %p156 = scmp.eq.s32.totalorder %s25, 0
      %p157 = por %p155, %p156
      %s158 = ssub.s32 %s19, %s26
      %p159 = scmp.eq.s32.totalorder %s158, 0
      %s161 = sadd.s32 %s160, 1
      %s162 = scalar_select %p159, %s160, %s161
      %p165 = pneg %p159
      %p166 = scmp.eq.s32.totalorder %s19, 1
      %p167 = por %p165, %p166
      %p168 = scmp.ne.s32.totalorder %s160, %s163
      %p169 = scmp.eq.s32.totalorder %s19, 0
      %p170 = por %p168, %p169
      %p171 = scmp.ne.s32.totalorder %s160, %s163
      %p172 = scmp.eq.s32.totalorder %s24, 1
      %p173 = por %p171, %p172
      %p174 = scmp.ne.s32.totalorder %s163, %s164
      %p175 = scmp.eq.s32.totalorder %s24, 0
      %p176 = por %p174, %p175
      %p177 = scmp.ne.s32.totalorder %s163, %s164
      %p178 = scmp.eq.s32.totalorder %s25, 1
      %p179 = por %p177, %p178
      %p181 = scmp.ne.s32.totalorder %s164, %s180
      %p182 = scmp.eq.s32.totalorder %s25, 0
      %p183 = por %p181, %p182
      %p184 = scmp.le.s32.totalorder 1, %s19
      %p185 = scmp.lt.s32.totalorder %s19, 3
      %p186 = pnand %p184, %p185
      %p187 = pneg %p186
      // Predicated region
      $region9: #{seperate_critic_forward.1} parent=5 // pred_check
        _
      $region10: #{seperate_critic_forward.1} parent=5 // pred_check_branch
        %189 = sbr.rel (%p186) target = $region12
      $region11: #{seperate_critic_forward.1} parent=5 // pred_region
        %s190 = ssub.s32 %s19, 1
        // Predicated region
        $region13: #{seperate_critic_forward.1} parent=11 // pred_check
          %p191 = pneg %p150
        $region14: #{seperate_critic_forward.1} parent=11 // pred_check_branch
          %193 = sbr.rel (%p191) target = $region16
        $region15: #{seperate_critic_forward.1} parent=11 // pred_region
          %s195 = ssub.s32 16, 16
          %196 = vsyncadd [#allocation6], %s195
          %s198 = sshll.u32 %s5, 4
          %s199 = int_to_ptr.vmem [resolvable:$true] %s198
          %201 = dma.vmem_to_smem %s199, 16, [#allocation5], [#allocation6]
        $region16: #{seperate_critic_forward.1} parent=11 // pred_fallthru
          _
      $region12: #{seperate_critic_forward.1} parent=5 // pred_fallthru
        _
      %p202 = scmp.lt.s32.totalorder %s19, 2
      // Predicated region
      $region17: #{seperate_critic_forward.1} parent=5 // pred_check
        %p203 = pneg %p202
      $region18: #{seperate_critic_forward.1} parent=5 // pred_check_branch
        %205 = sbr.rel (%p203) target = $region20
      $region19: #{seperate_critic_forward.1} parent=5 // pred_region
        // Predicated region
        $region21: #{seperate_critic_forward.1} parent=19 // pred_check
          %p206 = pneg %p39
        $region22: #{seperate_critic_forward.1} parent=19 // pred_check_branch
          %208 = sbr.rel (%p206) target = $region24
        $region23: #{seperate_critic_forward.1} parent=19 // pred_region
          %s209 = sand.u32 %s29, 1
          %s210 = sand.u32 %s29, 1
          %s211 = smul.addr %s210, 8
          %s212 = scalar_lea.vmem [#allocation4], %s211
          %s213 = smul.addr %s19, 4
          %s214 = scalar_lea.vmem %s1, %s213
          // Predicated region
          $region25: #{seperate_critic_forward.1} parent=23 // pred_check
            _
          $region26: #{seperate_critic_forward.1} parent=23 // pred_check_branch
            %216 = sbr.rel (0) target = $region28
          $region27: #{seperate_critic_forward.1} parent=23 // pred_region
            // Predicated region
            $region29: #{seperate_critic_forward.1} parent=27 // pred_check
              _
            $region30: #{seperate_critic_forward.1} parent=27 // pred_check_branch
              %218 = sbr.rel target = $region32
            $region31: #{seperate_critic_forward.1} parent=27 // pred_region
              // Predicated region
              $region44: #{seperate_critic_forward.1} parent=31 // pred_check
                _
              $region45: #{seperate_critic_forward.1} parent=31 // pred_check_branch
                %236 = sbr.rel (0) target = $region47
              $region46: #{seperate_critic_forward.1} parent=31 // pred_region
                loop: start=0, step=1, limit=1
                $region48: #{seperate_critic_forward.1} parent=46 // loop_pre_header
                  _
                $region49: #{seperate_critic_forward.1} parent=46 // loop_header
                  %s238 = sphi 0, %s242
                  %p239 = scmp.ge.s32.totalorder %s238, 1
                  %s243 = sphi %s214, %s214
                  %s244 = sphi %s212, %s212
                $region50: #{seperate_critic_forward.1} parent=46 // loop_header_branch
                  %241 = sbr.rel (%p239) target = $region54
                $region51: #{seperate_critic_forward.1} parent=46 // loop_body
                  _
                $region52: #{seperate_critic_forward.1} parent=46 // loop_footer
                  %s242 = sadd.s32 1, %s238
                $region53: #{seperate_critic_forward.1} parent=46 // loop_footer_branch
                  %237 = sbr.rel target = $region49
                $region54: #{seperate_critic_forward.1} parent=46 // loop_exit
                  _
                %s246 = ssub.s32 16, 1
                loop: start=0, step=1, limit=1
                $region55: #{seperate_critic_forward.1} parent=46 // loop_pre_header
                  _
                $region56: #{seperate_critic_forward.1} parent=46 // loop_header
                  %s248 = sphi 0, %s252
                  %p249 = scmp.ge.s32.totalorder %s248, 1
                  %s253 = sphi %s214, %s214
                  %s254 = sphi %s212, %s212
                $region57: #{seperate_critic_forward.1} parent=46 // loop_header_branch
                  %251 = sbr.rel (%p249) target = $region61
                $region58: #{seperate_critic_forward.1} parent=46 // loop_body
                  %v255 = vld [vmem:[%s253] sm:%s246]
                  %256 = vst [vmem:[%s254] sm:%s246] %v255
                  %v257 = vld [vmem:[%s253 + $0x8] sm:%s246]
                  %258 = vst [vmem:[%s254 + $0x4] sm:%s246] %v257
                $region59: #{seperate_critic_forward.1} parent=46 // loop_footer
                  %s252 = sadd.s32 1, %s248
                $region60: #{seperate_critic_forward.1} parent=46 // loop_footer_branch
                  %247 = sbr.rel target = $region56
                $region61: #{seperate_critic_forward.1} parent=46 // loop_exit
                  _
              $region47: #{seperate_critic_forward.1} parent=31 // pred_fallthru
                _
            $region32: #{seperate_critic_forward.1} parent=27 // pred_fallthru
              _
            // Predicated region
            $region33: #{seperate_critic_forward.1} parent=27 // pred_check
              _
            $region34: #{seperate_critic_forward.1} parent=27 // pred_check_branch
              %220 = sbr.rel (0) target = $region36
            $region35: #{seperate_critic_forward.1} parent=27 // pred_region
              %s222 = ssub.s32 16, 1
              loop: start=0, step=1, limit=1
              $region37: #{seperate_critic_forward.1} parent=35 // loop_pre_header
                _
              $region38: #{seperate_critic_forward.1} parent=35 // loop_header
                %s224 = sphi 0, %s228
                %p225 = scmp.ge.s32.totalorder %s224, 1
                %s229 = sphi %s214, %s214
                %s230 = sphi %s212, %s212
              $region39: #{seperate_critic_forward.1} parent=35 // loop_header_branch
                %227 = sbr.rel (%p225) target = $region43
              $region40: #{seperate_critic_forward.1} parent=35 // loop_body
                %v231 = vld [vmem:[%s229] sm:%s222]
                %232 = vst [vmem:[%s230] sm:%s222] %v231
                %v233 = vld [vmem:[%s229 + $0x8] sm:%s222]
                %234 = vst [vmem:[%s230 + $0x4] sm:%s222] %v233
              $region41: #{seperate_critic_forward.1} parent=35 // loop_footer
                %s228 = sadd.s32 1, %s224
              $region42: #{seperate_critic_forward.1} parent=35 // loop_footer_branch
                %223 = sbr.rel target = $region38
              $region43: #{seperate_critic_forward.1} parent=35 // loop_exit
                _
            $region36: #{seperate_critic_forward.1} parent=27 // pred_fallthru
              _
          $region28: #{seperate_critic_forward.1} parent=23 // pred_fallthru
            _
          %259 = vnop
        $region24: #{seperate_critic_forward.1} parent=19 // pred_fallthru
          _
        // Predicated region
        $region62: #{seperate_critic_forward.1} parent=19 // pred_check
          %p260 = pneg %p67
        $region63: #{seperate_critic_forward.1} parent=19 // pred_check_branch
          %262 = sbr.rel (%p260) target = $region65
        $region64: #{seperate_critic_forward.1} parent=19 // pred_region
          %s263 = sld [smem:[#allocation3 + %s19]]
          %p264 = scmp.lt.s32.totalorder %s263, 1
          %s265 = scalar_select %p264, %s263, 1
          %s266 = smul.addr %s265, 4
          %s267 = smul.addr %s266, 4
          %s268 = scalar_lea.vmem %s2, %s267
          %s269 = sld [smem:[#allocation3 + %s19]]
        $region65: #{seperate_critic_forward.1} parent=19 // pred_fallthru
          _
        // Predicated region
        $region66: #{seperate_critic_forward.1} parent=19 // pred_check
          %p270 = pneg %p95
        $region67: #{seperate_critic_forward.1} parent=19 // pred_check_branch
          %272 = sbr.rel (%p270) target = $region69
        $region68: #{seperate_critic_forward.1} parent=19 // pred_region
          %s273 = sld [smem:[#allocation3 + %s19]]
          %p274 = scmp.lt.s32.totalorder %s273, 1
          %s275 = scalar_select %p274, %s273, 1
          %s276 = smul.addr %s275, 4
          %s277 = smul.addr %s276, 8
          %s278 = scalar_lea.vmem %s3, %s277
          %s279 = sld [smem:[#allocation3 + %s19]]
        $region69: #{seperate_critic_forward.1} parent=19 // pred_fallthru
          _
        // Predicated region
        $region70: #{seperate_critic_forward.1} parent=19 // pred_check
          %p280 = pneg %p123
        $region71: #{seperate_critic_forward.1} parent=19 // pred_check_branch
          %282 = sbr.rel (%p280) target = $region73
        $region72: #{seperate_critic_forward.1} parent=19 // pred_region
          %s283 = sld [smem:[#allocation3 + %s19]]
          %p284 = scmp.lt.s32.totalorder %s283, 1
          %s285 = scalar_select %p284, %s283, 1
          %s286 = smul.addr %s285, 4
          %s287 = smul.addr %s286, 8
          %s288 = scalar_lea.vmem %s4, %s287
          %s289 = sld [smem:[#allocation3 + %s19]]
        $region73: #{seperate_critic_forward.1} parent=19 // pred_fallthru
          _
      $region20: #{seperate_critic_forward.1} parent=5 // pred_fallthru
        _
      %p290 = scmp.le.s32.totalorder 1, %s19
      %p291 = scmp.lt.s32.totalorder %s19, 3
      %p292 = pnand %p290, %p291
      %p293 = pneg %p292
      // Predicated region
      $region74: #{seperate_critic_forward.1} parent=5 // pred_check
        _
      $region75: #{seperate_critic_forward.1} parent=5 // pred_check_branch
        %295 = sbr.rel (%p292) target = $region77
      $region76: #{seperate_critic_forward.1} parent=5 // pred_region
        %s296 = ssub.s32 %s19, 1
        %s297 = sand.u32 %s32, 1
        %s298 = sand.u32 %s32, 1
        %s299 = smul.addr %s298, 8
        %s300 = scalar_lea.vmem [#allocation4], %s299
        // Predicated region
        $region78: #{seperate_critic_forward.1} parent=76 // pred_check
          %p301 = pneg %p45
        $region79: #{seperate_critic_forward.1} parent=76 // pred_check_branch
          %303 = sbr.rel (%p301) target = $region81
        $region80: #{seperate_critic_forward.1} parent=76 // pred_region
          _
        $region81: #{seperate_critic_forward.1} parent=76 // pred_fallthru
          _
        // Predicated region
        $region82: #{seperate_critic_forward.1} parent=76 // pred_check
          %p304 = pneg %p150
        $region83: #{seperate_critic_forward.1} parent=76 // pred_check_branch
          %306 = sbr.rel (%p304) target = $region85
        $region84: #{seperate_critic_forward.1} parent=76 // pred_region
          %307 = dma.done [#allocation6], 16
        $region85: #{seperate_critic_forward.1} parent=76 // pred_fallthru
          _
        %308 = sfence
        %s309 = sand.u32 %s32, 1
        %s310 = sand.u32 %s32, 1
        %s311 = smul.addr %s310, 8
        %s312 = scalar_lea.vmem [#allocation4], %s311
        %p313 = pneg %p45
        %p314 = pneg %p42
        %s315 = sld [smem:[#allocation3 + %s24]]
        %p316 = scmp.lt.s32.totalorder %s315, 1
        %s317 = scalar_select %p316, %s315, 1
        %s318 = smul.addr %s317, 4
        %s319 = smul.addr %s318, 4
        %s320 = scalar_lea.vmem %s2, %s319
        %p321 = pneg %p73
        %p322 = pneg %p70
        %s323 = sld [smem:[#allocation3 + %s24]]
        %p324 = scmp.lt.s32.totalorder %s323, 1
        %s325 = scalar_select %p324, %s323, 1
        %s326 = smul.addr %s325, 4
        %s327 = smul.addr %s326, 8
        %s328 = scalar_lea.vmem %s3, %s327
        %p329 = pneg %p101
        %p330 = pneg %p98
        %s331 = sld [smem:[#allocation3 + %s24]]
        %p332 = scmp.lt.s32.totalorder %s331, 1
        %s333 = scalar_select %p332, %s331, 1
        %s334 = smul.addr %s333, 4
        %s335 = smul.addr %s334, 8
        %s336 = scalar_lea.vmem %s4, %s335
        %p337 = pneg %p129
        %p338 = pneg %p126
        %p339 = pneg %p150
        %p340 = pneg %p147
        %p341 = pneg %p176
        %p342 = pneg %p173
        %p343 = scmp.lt.s32.totalorder %s24, 1
        %s344 = scalar_select %p343, %s24, 1
        %s345 = scalar_lea.vmem %s6, %s344
        %s346 = sld [smem:[#allocation3 + %s24]]
        %p347 = scmp.lt.s32.totalorder %s346, 1
        %s348 = scalar_select %p347, %s346, 1
        %s349 = smul.addr %s348, 4
        %s350 = smul.addr %s349, 4
        %s351 = scalar_lea.vmem %s2, %s350
        %s352 = sld [smem:[#allocation3 + %s24]]
        %s353 = sld [smem:[#allocation3 + %s24]]
        %p354 = scmp.lt.s32.totalorder %s353, 1
        %s355 = scalar_select %p354, %s353, 1
        %s356 = smul.addr %s355, 4
        %s357 = smul.addr %s356, 8
        %s358 = scalar_lea.vmem %s3, %s357
        %s359 = sld [smem:[#allocation3 + %s24]]
        %s360 = sld [smem:[#allocation3 + %s24]]
        %p361 = scmp.lt.s32.totalorder %s360, 1
        %s362 = scalar_select %p361, %s360, 1
        %s363 = smul.addr %s362, 4
        %s364 = smul.addr %s363, 8
        %s365 = scalar_lea.vmem %s4, %s364
        %s366 = sld [smem:[#allocation3 + %s24]]
        %p367 = scmp.lt.s32.totalorder %s24, 1
        %s368 = scalar_select %p367, %s24, 1
        %s369 = scalar_lea.vmem %s6, %s368
        %v371 = vld [vmem:[%s300] sm:$0xf]
        %v372 = vld [vmem:[%s300 + $0x4] sm:$0xf]
        %v373 = vld [vmem:[%s351] sm:$0xf]
        %v374 = vld [vmem:[%s351 + $0x4] sm:$0xf]
        %v375 = vld [vmem:[%s351 + $0x8] sm:$0xf]
        %v376 = vld [vmem:[%s351 + $0xc] sm:$0xf]
        %v377 = vld [vmem:[%s358] sm:$0xff]
        %v378 = vld [vmem:[%s358 + $0x8] sm:$0xff]
        %v379 = vld [vmem:[%s358 + $0x10] sm:$0xff]
        %v380 = vld [vmem:[%s358 + $0x18] sm:$0xff]
        %382 = vset.pattern.permute.xlu0 0
        %383 = vperm.xlu0 %382, %v377
        %v384 = vpop.permute.xlu0 %383
        %387 = vset.pattern.permute.xlu0 0
        %388 = vperm.xlu0 %387, %v378
        %v389 = vpop.permute.xlu0 %388
        %392 = vset.pattern.permute.xlu0 0
        %393 = vperm.xlu0 %392, %v379
        %v394 = vpop.permute.xlu0 %393
        %397 = vset.pattern.permute.xlu0 0
        %398 = vperm.xlu0 %397, %v380
        %v399 = vpop.permute.xlu0 %398
        %v405 = vunpack.c.l.b16 %v373
        %v406 = vunpack.c.l.b16 %v374
        %v407 = vunpack.c.l.b16 %v375
        %v408 = vunpack.c.l.b16 %v376
        %v409 = vpack.c.b16 %v406, %v405
        %v410 = vpack.c.b16 %v408, %v407
        %v413 = vunpack.c.l.b16 %v371
        %v414 = vunpack.c.l.b16 %v372
        %v415 = vpack.c.b16 %v414, %v413
        %vm417 = vcmask 130048
        %v419 = vsel %vm417, %v409, 0
        %v422 = vsel %vm417, %v410, 0
        %424 = vmatprep.subr.bf16.mxu0 0
        %425 = vmatpush1.bf16.msra.mxu0 0
        %426 = vmatprep.subr.bf16.mxu0 0
        %427 = vmatpush1.bf16.msra.mxu0 0
        %428 = vmatprep.subr.bf16.mxu0 0
        %429 = vmatpush1.bf16.msra.mxu0 0
        %430 = vmatprep.subr.bf16.mxu0 0
        %431 = vmatpush1.bf16.msra.mxu0 0
        %432 = vmatprep.subr.bf16.mxu0 0
        %433 = vmatpush1.bf16.msra.mxu0 0
        %434 = vmatprep.subr.bf16.mxu0 0
        %435 = vmatpush1.bf16.msra.mxu0 0
        %436 = vmatprep.subr.bf16.mxu0 0
        %437 = vmatpush1.bf16.msra.mxu0 0
        %438 = vmatprep.subr.bf16.mxu0 0
        %439 = vmatpush1.bf16.msra.mxu0 %v415
        %440 = vmatprep.subr.bf16.mxu0 0
        %441 = vmatpush2.bf16.msra.mxu0 0
        %442 = vmatprep.subr.bf16.mxu0 0
        %443 = vmatpush2.bf16.msra.mxu0 0
        %444 = vmatprep.subr.bf16.mxu0 0
        %445 = vmatpush2.bf16.msra.mxu0 0
        %446 = vmatprep.subr.bf16.mxu0 0
        %447 = vmatpush2.bf16.msra.mxu0 0
        %448 = vmatprep.subr.bf16.mxu0 0
        %449 = vmatpush2.bf16.msra.mxu0 0
        %450 = vmatprep.subr.bf16.mxu0 0
        %451 = vmatpush2.bf16.msra.mxu0 0
        %452 = vmatprep.subr.bf16.mxu0 0
        %453 = vmatpush2.bf16.msra.mxu0 0
        %454 = vmatprep.subr.bf16.mxu0 0
        %455 = vmatpush2.bf16.msra.mxu0 0
        %456 = vmatprep.mubr.bf16.mxu0 0
        %457 = vmatmul.mubr.bf16.gmra.mxu0 %v419
        %v458 = vpop.f32.mrf.mxu0
        %v459 = vadd.f32 %v384, %v458
        %v460 = vpop.f32.mrf.mxu0
        %v461 = vpop.f32.mrf.mxu0
        %v462 = vadd.f32 %v389, %v461
        %v463 = vpop.f32.mrf.mxu0
        %464 = vmatprep.mubr.bf16.mxu0 0
        %465 = vmatmul.mubr.bf16.gmra.mxu0 %v422
        %v466 = vpop.f32.mrf.mxu0
        %v467 = vadd.f32 %v394, %v466
        %v468 = vpop.f32.mrf.mxu0
        %v469 = vpop.f32.mrf.mxu0
        %v470 = vadd.f32 %v399, %v469
        %v471 = vpop.f32.mrf.mxu0
        %472 = vdwg.mxu0
        %v473 = vmax.f32 %v459, 0.0
        %v474 = vmax.f32 %v462, 0.0
        %v475 = vmax.f32 %v467, 0.0
        %v476 = vmax.f32 %v470, 0.0
        %v477 = vld [vmem:[%s365] sm:$0xff]
        %v478 = vld [vmem:[%s365 + $0x8] sm:$0xff]
        %v479 = vld [vmem:[%s365 + $0x10] sm:$0xff]
        %v480 = vld [vmem:[%s365 + $0x18] sm:$0xff]
        %482 = vset.pattern.permute.xlu0 0
        %483 = vperm.xlu0 %482, %v477
        %v484 = vpop.permute.xlu0 %483
        %487 = vset.pattern.permute.xlu0 0
        %488 = vperm.xlu0 %487, %v478
        %v489 = vpop.permute.xlu0 %488
        %492 = vset.pattern.permute.xlu0 0
        %493 = vperm.xlu0 %492, %v479
        %v494 = vpop.permute.xlu0 %493
        %497 = vset.pattern.permute.xlu0 0
        %498 = vperm.xlu0 %497, %v480
        %v499 = vpop.permute.xlu0 %498
        %v501 = vmul.f32 %v473, %v484
        %v502 = vmul.f32 %v474, %v489
        %v503 = vmul.f32 %v475, %v494
        %v504 = vmul.f32 %v476, %v499
        %v505 = vadd.f32 %v501, %v502
        %v506 = vadd.f32 %v505, %v503
        %v507 = vadd.f32 %v506, %v504
        %v508 = vrot.slane %v507, 4
        %v509 = vadd.f32 %v507, %v508
        %v510 = vrot.slane %v509, 2
        %v511 = vadd.f32 %v509, %v510
        %v512 = vrot.slane %v511, 1
        %v513 = vadd.f32 %v511, %v512
        %s514 = sld [smem:[#allocation3 + %s24]]
        %s515 = sld [smem:[#allocation5 + %s514]]
        %v516 = vstv %s515
        %v517 = vadd.f32 %v513, %v516
        %518 = vst [vmem:[%s369] sm:$0x1] %v517
        %p519 = scmp.lt.s32.totalorder %s24, 1
        %s520 = scalar_select %p519, %s24, 1
        %s521 = scalar_lea.vmem %s6, %s520
        // Predicated region
        $region86: #{seperate_critic_forward.1} parent=76 // pred_check
          %p522 = pneg %p173
        $region87: #{seperate_critic_forward.1} parent=76 // pred_check_branch
          %524 = sbr.rel (%p522) target = $region89
        $region88: #{seperate_critic_forward.1} parent=76 // pred_region
          _
        $region89: #{seperate_critic_forward.1} parent=76 // pred_fallthru
          _
      $region77: #{seperate_critic_forward.1} parent=5 // pred_fallthru
        _
      %p525 = scmp.le.s32.totalorder 2, %s19
      // Predicated region
      $region90: #{seperate_critic_forward.1} parent=5 // pred_check
        %p526 = pneg %p525
      $region91: #{seperate_critic_forward.1} parent=5 // pred_check_branch
        %528 = sbr.rel (%p526) target = $region93
      $region92: #{seperate_critic_forward.1} parent=5 // pred_region
        %s529 = ssub.s32 %s19, 2
        // Predicated region
        $region94: #{seperate_critic_forward.1} parent=92 // pred_check
          %p530 = pneg %p179
        $region95: #{seperate_critic_forward.1} parent=92 // pred_check_branch
          %532 = sbr.rel (%p530) target = $region97
        $region96: #{seperate_critic_forward.1} parent=92 // pred_region
          %p533 = scmp.lt.s32.totalorder %s25, 1
          %s534 = scalar_select %p533, %s25, 1
          %s535 = scalar_lea.vmem %s6, %s534
        $region97: #{seperate_critic_forward.1} parent=92 // pred_fallthru
          _
      $region93: #{seperate_critic_forward.1} parent=5 // pred_fallthru
        _
    $region6: #{seperate_critic_forward.1} parent=1 // loop_footer
      %s23 = sadd.s32 1, %s19
    $region7: #{seperate_critic_forward.1} parent=1 // loop_footer_branch
      %18 = sbr.rel target = $region3
    $region8: #{seperate_critic_forward.1} parent=1 // loop_exit
      _
    %536 = vsyncpa [#allocation6], 1
    %s537 = scalar_lea.sflag [#allocation6], 1
    %538 = vsyncpa %s537, 1

</llo_original>
